<compile_context>
chip_gen: v6e
topology: v6e:2x2x1
jax: 0.10.0
libtpu: 0.0.40
codegen_flags: <defaults>
</compile_context>

<pallas_src>
import jax
import jax.numpy as jnp
from jax.experimental import pallas as pl
from jax.experimental.pallas import tpu as pltpu


def _rup(x, m):
    return ((x + m - 1) // m) * m


# ----------------------------------------------------------------------------
# Pallas GEMM kernel (used for every conv (via im2col) and every linear layer)
# ----------------------------------------------------------------------------
_KB_MAX = 4096   # max K handled as a single full-K block (no K-axis tiling)


def _mm_kernel(a_ref, b_ref, bias_ref, o_ref):
    # o_ref is the f32 accumulator (output block resident across the k axis).
    @pl.when(pl.program_id(2) == 0)
    def _():
        o_ref[...] = jnp.broadcast_to(bias_ref[...], o_ref.shape)

    o_ref[...] += jnp.dot(a_ref[...], b_ref[...],
                          preferred_element_type=jnp.float32)


def pallas_matmul(a, b, bias=None):
    """a: (M, K) @ b: (K, N) + bias[N] -> (M, N) float32.

    bf16 MXU inputs, f32 accumulation, bias fused in the GEMM epilogue."""
    M, K = a.shape
    K2, N = b.shape
    assert K == K2
    a = a.astype(jnp.bfloat16)
    b = b.astype(jnp.bfloat16)
    if bias is None:
        bias = jnp.zeros((N,), jnp.float32)
    bias = bias.astype(jnp.float32)

    TM = 256 if M > 128 else 128
    TN = 256 if N > 128 else 128
    Mp, Np = _rup(M, TM), _rup(N, TN)
    if K <= _KB_MAX:
        Kb, Kp = K, K                  # full-K block, no zero padding along K
    else:
        Kb = 2048
        Kp = _rup(K, Kb)

    ap = a if (Mp == M and Kp == K) else jnp.pad(a, ((0, Mp - M), (0, Kp - K)))
    bp = b if (Kp == K and Np == N) else jnp.pad(b, ((0, Kp - K), (0, Np - N)))
    biasp = (bias if Np == N else jnp.pad(bias, (0, Np - N))).reshape(1, Np)

    out = pl.pallas_call(
        _mm_kernel,
        out_shape=jax.ShapeDtypeStruct((Mp, Np), jnp.float32),
        grid=(Mp // TM, Np // TN, Kp // Kb),
        in_specs=[pl.BlockSpec((TM, Kb), lambda i, j, k: (i, k)),
                  pl.BlockSpec((Kb, TN), lambda i, j, k: (k, j)),
                  pl.BlockSpec((1, TN), lambda i, j, k: (0, j))],
        out_specs=pl.BlockSpec((TM, TN), lambda i, j, k: (i, j)),
        compiler_params=pltpu.CompilerParams(
            dimension_semantics=("parallel", "parallel", "arbitrary")),
    )(ap, bp, biasp)
    return out[:M, :N]


# ----------------------------------------------------------------------------
# Pallas fused gated-conv activation: sigmoid(a) * ELU(g) on 2D GEMM outputs
# ----------------------------------------------------------------------------
def _gate_kernel(a_ref, g_ref, o_ref):
    a = a_ref[...]
    g = g_ref[...]
    elu = jnp.where(g > 0.0, g, jnp.expm1(jnp.minimum(g, 0.0)))
    o_ref[...] = jax.nn.sigmoid(a) * elu


def gated_activation_2d(a, g):
    """sigmoid(a) * ELU(g), both shaped (rows, C) in f32."""
    M, C = a.shape
    RT = 256 if M >= 256 else _rup(M, 8)
    Mp = _rup(M, RT)
    if Mp != M:
        a = jnp.pad(a, ((0, Mp - M), (0, 0)))
        g = jnp.pad(g, ((0, Mp - M), (0, 0)))
    out = pl.pallas_call(
        _gate_kernel,
        out_shape=jax.ShapeDtypeStruct((Mp, C), jnp.float32),
        grid=(Mp // RT,),
        in_specs=[pl.BlockSpec((RT, C), lambda i: (i, 0)),
                  pl.BlockSpec((RT, C), lambda i: (i, 0))],
        out_specs=pl.BlockSpec((RT, C), lambda i: (i, 0)),
        compiler_params=pltpu.CompilerParams(
            dimension_semantics=("parallel",)),
    )(a.astype(jnp.float32), g.astype(jnp.float32))
    return out[:M]


# ----------------------------------------------------------------------------
# Conv / linear on top of the Pallas GEMM
# ----------------------------------------------------------------------------
def _im2col(x, kh, kw, stride, pad):
    """x NCHW -> (B*Ho*Wo, kh*kw*Cin) patch matrix (single NCHW->NHWC transpose)."""
    B, Cin, H, W = x.shape
    xp = jnp.pad(x, ((0, 0), (0, 0), (pad, pad), (pad, pad)))
    Ho = (H + 2 * pad - kh) // stride + 1
    Wo = (W + 2 * pad - kw) // stride + 1
    xh = xp.transpose(0, 2, 3, 1)                              # NHWC
    cols = []
    for i in range(kh):
        for j in range(kw):
            cols.append(xh[:, i:i + stride * (Ho - 1) + 1:stride,
                           j:j + stride * (Wo - 1) + 1:stride, :])
    A = jnp.concatenate(cols, axis=-1).reshape(B * Ho * Wo, kh * kw * Cin)
    return A, B, Ho, Wo


def conv2d_gemm(x, w, b=None, stride=1, pad=1, as_2d=False):
    """x: NCHW, w: (Cout, Cin, kh, kw) (PyTorch layout)."""
    Cout, Cin, kh, kw = w.shape
    A, B, Ho, Wo = _im2col(x, kh, kw, stride, pad)
    Wm = w.transpose(2, 3, 1, 0).reshape(kh * kw * Cin, Cout)  # match im2col order
    out = pallas_matmul(A, Wm, b)                              # (B*Ho*Wo, Cout)
    if as_2d:
        return out, (B, Ho, Wo)
    return out.reshape(B, Ho, Wo, Cout).transpose(0, 3, 1, 2)


def gated_conv(x, p, stride=2, pad=1):
    """GatedConv: sigmoid(conv1(x)) * ELU(conv2(x)) with ONE shared im2col/GEMM."""
    Cout = p['w1'].shape[0]
    w_cat = jnp.concatenate([p['w1'], p['w2']], axis=0)        # (2*Cout, Cin, kh, kw)
    b_cat = jnp.concatenate([p['b1'], p['b2']], axis=0)
    out2d, (B, Ho, Wo) = conv2d_gemm(x, w_cat, b_cat, stride=stride, pad=pad, as_2d=True)
    gated = gated_activation_2d(out2d[:, :Cout], out2d[:, Cout:])
    return gated.reshape(B, Ho, Wo, Cout).transpose(0, 3, 1, 2)


# ----------------------------------------------------------------------------
# Plain-JAX glue: normalization, resizing, masks
# ----------------------------------------------------------------------------
def batch_norm(x, gamma=None, beta=None, eps=1e-5):
    mean = x.mean(axis=(0, 2, 3), keepdims=True)
    var = x.var(axis=(0, 2, 3), keepdims=True)
    xn = (x - mean) / jnp.sqrt(var + eps)
    if gamma is not None:
        xn = xn * gamma.reshape(1, -1, 1, 1) + beta.reshape(1, -1, 1, 1)
    return xn


def nearest_resize(x, size):
    B, C, H, W = x.shape
    Ho, Wo = size
    yi = jnp.floor(jnp.arange(Ho) * (H / Ho)).astype(jnp.int32)
    xi = jnp.floor(jnp.arange(Wo) * (W / Wo)).astype(jnp.int32)
    return x[:, :, yi[:, None], xi[None, :]]


def bilinear_resize(x, size, align_corners=False):
    B, C, H, W = x.shape
    Ho, Wo = size
    if align_corners:
        sy = (H - 1) / (Ho - 1) if Ho > 1 else 0.0
        sx = (W - 1) / (Wo - 1) if Wo > 1 else 0.0
        ys = jnp.arange(Ho, dtype=jnp.float32) * sy
        xs = jnp.arange(Wo, dtype=jnp.float32) * sx
    else:
        ys = jnp.maximum((jnp.arange(Ho, dtype=jnp.float32) + 0.5) * (H / Ho) - 0.5, 0.0)
        xs = jnp.maximum((jnp.arange(Wo, dtype=jnp.float32) + 0.5) * (W / Wo) - 0.5, 0.0)
    y0 = jnp.floor(ys).astype(jnp.int32)
    x0 = jnp.floor(xs).astype(jnp.int32)
    y1 = jnp.minimum(y0 + 1, H - 1)
    x1 = jnp.minimum(x0 + 1, W - 1)
    wy = (ys - y0.astype(jnp.float32))
    wx = (xs - x0.astype(jnp.float32))

    def g(yi, xi):
        return x[:, :, yi[:, None], xi[None, :]]

    w00 = (1 - wy)[:, None] * (1 - wx)[None, :]
    w01 = (1 - wy)[:, None] * wx[None, :]
    w10 = wy[:, None] * (1 - wx)[None, :]
    w11 = wy[:, None] * wx[None, :]
    return g(y0, x0) * w00 + g(y0, x1) * w01 + g(y1, x0) * w10 + g(y1, x1) * w11


def adaptive_avg_pool(x, s):
    B, C, H, W = x.shape
    rows = []
    for i in range(s):
        h0, h1 = (i * H) // s, -(-(i + 1) * H // s)
        cols = []
        for j in range(s):
            w0, w1 = (j * W) // s, -(-(j + 1) * W // s)
            cols.append(x[:, :, h0:h1, w0:w1].mean(axis=(2, 3)))
        rows.append(jnp.stack(cols, axis=-1))
    return jnp.stack(rows, axis=-2)  # (B, C, s, s)


def bbox_mask_jax(bbox, H, W):
    """Matches bbox_mask() from the reference (requires H == W as in the ref)."""
    b, o, _ = bbox.shape
    x0 = bbox[..., 0:1]
    y0 = bbox[..., 1:2]
    ww = bbox[..., 2:3]
    hh = bbox[..., 3:4]
    X = jnp.linspace(0.0, 1.0, W).reshape(1, 1, W)
    Y = jnp.linspace(0.0, 1.0, H).reshape(1, 1, H)
    Xn = (X - x0) / ww
    Yn = (Y - y0) / hh
    x_out = ((Xn < 0) | (Xn > 1)).astype(jnp.float32).reshape(b, o, 1, W)
    y_out = ((Yn < 0) | (Yn > 1)).astype(jnp.float32).reshape(b, o, H, 1)
    return 1.0 - jnp.minimum(x_out + y_out, 1.0)


# ----------------------------------------------------------------------------
# Sub-modules
# ----------------------------------------------------------------------------
def spatial_adaptive_bn(x, w_vec, obj_mask, p, b, obj):
    # TODO(synk): SpatialAdaptiveSynBatchNorm2d source not provided; this follows
    # LostGAN-v2 semantics (affine-free sync BN + per-object linear gamma/beta
    # composited spatially with the bilinear-resized object masks).
    _, C, h, w = x.shape
    xn = batch_norm(x)                                      # affine=False
    # gamma/beta linears fused into a single GEMM (shared w_vec input).
    w_cat = jnp.concatenate([p['wg'], p['wb']], axis=1)     # (num_w, 2C)
    b_cat = jnp.concatenate([p['bg'], p['bb']], axis=0)
    gb = pallas_matmul(w_vec, w_cat, b_cat)                 # (b*obj, 2C)
    gamma = gb[:, :C].reshape(b, obj, C)
    beta = gb[:, C:].reshape(b, obj, C)
    m = bilinear_resize(obj_mask, (h, w), align_corners=False)     # (b, obj, h, w)
    msum = m.sum(axis=1) + 1e-6                                     # (b, h, w)
    g_map = jnp.einsum('bohw,boc->bchw', m, gamma) / msum[:, None]
    b_map = jnp.einsum('bohw,boc->bchw', m, beta) / msum[:, None]
    return g_map * xn + b_map


def psp_module(feats, p):
    B, C, H, W = feats.shape
    priors = []
    for size, sp in zip((1, 2, 3, 6), p['stages']):
        y = adaptive_avg_pool(feats, size)
        y = conv2d_gemm(y, sp['conv_w'], None, stride=1, pad=0)
        y = jax.nn.relu(batch_norm(y, sp['bn_g'], sp['bn_b']))
        y = bilinear_resize(y, (H, W), align_corners=True)
        priors.append(y)
    priors.append(feats)
    y = jnp.concatenate(priors, axis=1)
    y = conv2d_gemm(y, p['bottle_w'], None, stride=1, pad=1)
    y = jax.nn.relu(batch_norm(y, p['bottle_bn_g'], p['bottle_bn_b']))
    # TODO(synk): Dropout2d(0.1) treated as identity (deterministic forward).
    return y


def res_block(x, w_vec, obj_mask, p, b, obj, predict_mask=True, psp=False):
    # residual branch (all blocks in TripleGenerator use upsample=True)
    r = spatial_adaptive_bn(x, w_vec, obj_mask, p['b1'], b, obj)
    r = jax.nn.relu(r)
    r = nearest_resize(r, (r.shape[2] * 2, r.shape[3] * 2))
    r = conv2d_gemm(r, p['conv1_w'], p['conv1_b'], stride=1, pad=1)
    r = spatial_adaptive_bn(r, w_vec, obj_mask, p['b2'], b, obj)
    r = jax.nn.relu(r)
    r = conv2d_gemm(r, p['conv2_w'], p['conv2_b'], stride=1, pad=1)
    # learnable shortcut
    sc = nearest_resize(x, (x.shape[2] * 2, x.shape[3] * 2))
    sc = conv2d_gemm(sc, p['csc_w'], p['csc_b'], stride=1, pad=0)
    out = r + sc
    if not predict_mask:
        return out, None
    if psp:
        mk = psp_module(out, p['psp'])
        mk = conv2d_gemm(mk, p['mask2_w'], p['mask2_b'], stride=1, pad=0)
    else:
        mk = conv2d_gemm(out, p['mask1_w'], p['mask1_b'], stride=1, pad=1)
        mk = jax.nn.relu(batch_norm(mk, p['mask_bn_g'], p['mask_bn_b']))
        mk = conv2d_gemm(mk, p['mask2_w'], p['mask2_b'], stride=1, pad=0)
    return out, mk


def mask_regress(w_vec, s_bbox, o_bbox, p, b, obj):
    # TODO(synk): MaskRegressNetv3 source not provided; approximated by a Pallas
    # linear -> sigmoid 64x64 map, gated by each bbox's binary mask.
    m = jax.nn.sigmoid(pallas_matmul(w_vec, p['w'], p['b'])).reshape(b, obj, 64, 64)
    s_mask = m * bbox_mask_jax(s_bbox, 64, 64)
    o_mask = m * bbox_mask_jax(o_bbox, 64, 64)
    return s_mask, o_mask


def compute_stage_bbox(stage_mask, y, bmask, bbox_mask_, alpha_param, b, obj):
    hh, ww = stage_mask.shape[2], stage_mask.shape[3]
    sel = stage_mask[jnp.arange(b)[:, None], y]                     # (b, obj, hh, ww)
    seman = jax.nn.sigmoid(sel) * nearest_resize(bbox_mask_, (hh, ww))
    num_classes = alpha_param.shape[1]
    alpha_full = jnp.broadcast_to(jax.nn.sigmoid(alpha_param), (b, num_classes, 1))
    alpha = jnp.take_along_axis(alpha_full, y[:, :, None], axis=1)[..., None]  # (b,obj,1,1)
    return (bilinear_resize(bmask, (hh, ww), align_corners=False) * (1 - alpha)
            + seman * alpha)


# ----------------------------------------------------------------------------
# Parameter construction (deterministic synthetic weights)
# ----------------------------------------------------------------------------
def init_params(key, ch=8, z_dim=128, num_classes=10, pred_classes=7, output_dim=3):
    # TODO(synk): spectral_norm wrappers and orthogonal init are replaced by plain
    # scaled-normal deterministic init (synthetic weights, no checkpoint).
    num_w = 128 + 180 * 3
    keys = iter(jax.random.split(key, 256))

    def nrm(shape, scale=0.05):
        return scale * jax.random.normal(next(keys), shape, jnp.float32)

    zeros = lambda *s: jnp.zeros(s, jnp.float32)
    ones = lambda *s: jnp.ones(s, jnp.float32)

    def sabn_p(cin):
        return {'wg': nrm((num_w, cin)), 'bg': zeros(cin),
                'wb': nrm((num_w, cin)), 'bb': zeros(cin)}

    def res_p(cin, cout, predict_mask=True, psp=False):
        p = {'b1': sabn_p(cin), 'b2': sabn_p(cout),
             'conv1_w': nrm((cout, cin, 3, 3)), 'conv1_b': zeros(cout),
             'conv2_w': nrm((cout, cout, 3, 3)), 'conv2_b': zeros(cout),
             'csc_w': nrm((cout, cin, 1, 1)), 'csc_b': zeros(cout)}
        if predict_mask:
            if psp:
                stages = [{'conv_w': nrm((100, cout, 1, 1)),
                           'bn_g': ones(100), 'bn_b': zeros(100)} for _ in range(4)]
                p['psp'] = {'stages': stages,
                            'bottle_w': nrm((100, cout + 4 * 100, 3, 3)),
                            'bottle_bn_g': ones(100), 'bottle_bn_b': zeros(100)}
            else:
                p['mask1_w'] = nrm((100, cout, 3, 3))
                p['mask1_b'] = zeros(100)
                p['mask_bn_g'] = ones(100)
                p['mask_bn_b'] = zeros(100)
            p['mask2_w'] = nrm((184, 100, 1, 1))
            p['mask2_b'] = zeros(184)
        return p

    params = {
        'label_emb': nrm((num_classes, 180), 0.1),
        'pred_emb': nrm((pred_classes, 180), 0.1),
        'fc_w': nrm((z_dim, 4 * 4 * 16 * ch)),        # stored (in, out)
        'fc_b': zeros(4 * 4 * 16 * ch),
        'alphas': [jnp.zeros((1, num_classes, 1), jnp.float32) for _ in range(4)],
        'mask_regress': {'w': nrm((num_w, 64 * 64)), 'b': zeros(64 * 64)},
        'final_bn_g': ones(ch), 'final_bn_b': zeros(ch),
        'final_conv_w': nrm((output_dim, ch, 3, 3)), 'final_conv_b': zeros(output_dim),
    }
    enc_specs = [(4, ch), (ch, 2 * ch), (2 * ch, 4 * ch), (4 * ch, 8 * ch), (8 * ch, 16 * ch)]
    params['enc'] = [{'w1': nrm((co, ci, 3, 3)), 'b1': zeros(co),
                      'w2': nrm((co, ci, 3, 3)), 'b2': zeros(co)} for ci, co in enc_specs]
    params['res'] = [res_p(32 * ch, 16 * ch),
                     res_p(24 * ch, 8 * ch),
                     res_p(12 * ch, 4 * ch),
                     res_p(6 * ch, 2 * ch, psp=True),
                     res_p(3 * ch, ch, predict_mask=False)]
    return params


# ----------------------------------------------------------------------------
# TripleGenerator forward
# ----------------------------------------------------------------------------
def triple_generator_forward(params, z, bbox, z_im, y, triples, masked_images):
    b, obj = z.shape[0], z.shape[1]

    # ----- gated-conv encoder (stride-2 each); conv1/conv2 fused into one GEMM -----
    m = masked_images
    encs = []
    for p in params['enc']:
        m = gated_conv(m, p, stride=2, pad=1)
        encs.append(m)
    enc_1, enc_2, enc_3, enc_4, enc_5 = encs

    # ----- conditioning vector w -----
    z_flat = z.reshape(b * obj, -1)
    s, p_idx, o = triples[..., 0], triples[..., 1], triples[..., 2]
    s_emb = jnp.take_along_axis(y, s, axis=-1)
    o_emb = jnp.take_along_axis(y, o, axis=-1)
    lab = params['label_emb'][jnp.concatenate([s_emb, o_emb], axis=0)]   # (2b, obj, 180)
    pred = params['pred_emb'][p_idx]                                     # (b, obj, 180)
    s_lab, o_lab = lab[:b], lab[b:]
    total = jnp.concatenate([s_lab, pred, o_lab], axis=-1).reshape(b * obj, -1)
    w_vec = jnp.concatenate([z_flat, total], axis=-1)                    # (b*obj, num_w)

    s_bbox = jnp.take_along_axis(bbox, jnp.broadcast_to(s[:, :, None], (b, obj, 4)), axis=1)
    o_bbox = jnp.take_along_axis(bbox, jnp.broadcast_to(o[:, :, None], (b, obj, 4)), axis=1)

    s_mask, o_mask = mask_regress(w_vec, s_bbox, o_bbox, params['mask_regress'], b, obj)
    bmask = 0.5 * (s_mask + o_mask)
    bbox_mask_ = bbox_mask_jax(bbox, 64, 64)

    # ----- decoder -----
    x = pallas_matmul(z_im, params['fc_w'], params['fc_b']).reshape(b, -1, 4, 4)
    x = jnp.concatenate([x, enc_5], axis=1)

    x, stage_mask = res_block(x, w_vec, bmask, params['res'][0], b, obj)
    stage_bbox = compute_stage_bbox(stage_mask, y, bmask, bbox_mask_, params['alphas'][0], b, obj)

    x = jnp.concatenate([x, enc_4], axis=1)
    x, stage_mask = res_block(x, w_vec, stage_bbox, params['res'][1], b, obj)
    stage_bbox = compute_stage_bbox(stage_mask, y, bmask, bbox_mask_, params['alphas'][1], b, obj)

    x = jnp.concatenate([x, enc_3], axis=1)
    x, stage_mask = res_block(x, w_vec, stage_bbox, params['res'][2], b, obj)
    stage_bbox = compute_stage_bbox(stage_mask, y, bmask, bbox_mask_, params['alphas'][2], b, obj)

    x = jnp.concatenate([x, enc_2], axis=1)
    x, stage_mask = res_block(x, w_vec, stage_bbox, params['res'][3], b, obj, psp=True)
    stage_bbox = compute_stage_bbox(stage_mask, y, bmask, bbox_mask_, params['alphas'][3], b, obj)

    x = jnp.concatenate([x, enc_1], axis=1)
    x, _ = res_block(x, w_vec, stage_bbox, params['res'][4], b, obj, predict_mask=False)

    # ----- final head -----
    x = jax.nn.relu(batch_norm(x, params['final_bn_g'], params['final_bn_b']))
    x = conv2d_gemm(x, params['final_conv_w'], params['final_conv_b'], stride=1, pad=1)
    return jnp.tanh(x)


# ----------------------------------------------------------------------------
# Driver
# ----------------------------------------------------------------------------
if __name__ == "__main__":
    ch = 8           # small 'ch' (reference default 64) to keep the test compact
    b, obj = 1, 2
    key = jax.random.PRNGKey(0)
    kp, kz, kzi, kimg = jax.random.split(key, 4)

    params = init_params(kp, ch=ch)

    z = jax.random.normal(kz, (b, obj, 128), jnp.float32)
    z_im = jax.random.normal(kzi, (b, 128), jnp.float32)
    masked_images = jax.random.normal(kimg, (b, 4, 128, 128), jnp.float32)
    bbox = jnp.array([[[0.10, 0.10, 0.50, 0.50],
                       [0.40, 0.30, 0.40, 0.60]]], jnp.float32)
    y = jnp.array([[3, 7]], jnp.int32)
    triples = jnp.array([[[0, 2, 1],
                          [1, 5, 0]]], jnp.int32)      # (subject, predicate, object)

    out = triple_generator_forward(params, z, bbox, z_im, y, triples, masked_images)
    out = jax.block_until_ready(out)

    assert out.shape == (b, 3, 128, 128), out.shape
    assert bool(jnp.all(jnp.isfinite(out)))
    print("KERNEL_OK")
</pallas_src>

<mosaic_0001>
module attributes {stable_mosaic.version = 11 : i64} {
  func.func @_mm_kernel(%arg0: i32, %arg1: i32, %arg2: i32, %arg3: memref<256x36xbf16, #tpu.memory_space<vmem>>, %arg4: memref<36x128xbf16, #tpu.memory_space<vmem>>, %arg5: memref<1x128xf32, #tpu.memory_space<vmem>>, %arg6: memref<256x128xf32, #tpu.memory_space<vmem>>) attributes {dimension_semantics = [#tpu.dimension_semantics<parallel>, #tpu.dimension_semantics<parallel>, #tpu.dimension_semantics<arbitrary>], iteration_bounds = array<i64: 16, 1, 1>, scalar_prefetch = 0 : i64, scratch_operands = 0 : i64, tpu.core_type = #tpu.core_type<tc>, window_params = [{transform_indices = @transform_0, window_bounds = array<i64: 256, 36>}, {transform_indices = @transform_1, window_bounds = array<i64: 36, 128>}, {transform_indices = @transform_2, window_bounds = array<i64: 1, 128>}, {transform_indices = @transform_3, window_bounds = array<i64: 256, 128>}]} {
    %c0_i32 = arith.constant 0 : i32
    %0 = arith.cmpi eq, %arg2, %c0_i32 : i32
    %1 = arith.extui %0 : i1 to i32
    %c0_i32_0 = arith.constant 0 : i32
    %2 = arith.cmpi ne, %1, %c0_i32_0 : i32
    scf.if %2 {
      %c0_8 = arith.constant 0 : index
      %c0_9 = arith.constant 0 : index
      %9 = vector.load %arg5[%c0_8, %c0_9] : memref<1x128xf32, #tpu.memory_space<vmem>>, vector<1x128xf32>
      %10 = vector.shape_cast %9 : vector<1x128xf32> to vector<1x128xf32>
      %11 = vector.broadcast %10 : vector<1x128xf32> to vector<256x128xf32>
      %c0_10 = arith.constant 0 : index
      %c0_11 = arith.constant 0 : index
      %12 = vector.load %arg6[%c0_10, %c0_11] : memref<256x128xf32, #tpu.memory_space<vmem>>, vector<256x128xf32>
      tpu.vector_store %arg6[%c0_10, %c0_11], %11 {strides = array<i32>} : memref<256x128xf32, #tpu.memory_space<vmem>>, vector<256x128xf32>,
    } else {
    }
    %c0 = arith.constant 0 : index
    %c0_1 = arith.constant 0 : index
    %3 = vector.load %arg6[%c0, %c0_1] : memref<256x128xf32, #tpu.memory_space<vmem>>, vector<256x128xf32>
    %c0_2 = arith.constant 0 : index
    %c0_3 = arith.constant 0 : index
    %4 = vector.load %arg3[%c0_2, %c0_3] : memref<256x36xbf16, #tpu.memory_space<vmem>>, vector<256x36xbf16>
    %c0_4 = arith.constant 0 : index
    %c0_5 = arith.constant 0 : index
    %5 = vector.load %arg4[%c0_4, %c0_5] : memref<36x128xbf16, #tpu.memory_space<vmem>>, vector<36x128xbf16>
    %cst = arith.constant dense<0.000000e+00> : vector<256x128xf32>
    %6 = tpu.matmul %4, %5, %cst {dimension_numbers = #tpu.dot_dimension_numbers<[1], [0], [0], [1], [0, 0, 1, 1], [], []>} : vector<256x36xbf16>, vector<36x128xbf16>, vector<256x128xf32> -> vector<256x128xf32>
    %7 = arith.addf %3, %6 : vector<256x128xf32>
    %c0_6 = arith.constant 0 : index
    %c0_7 = arith.constant 0 : index
    %8 = vector.load %arg6[%c0_6, %c0_7] : memref<256x128xf32, #tpu.memory_space<vmem>>, vector<256x128xf32>
    tpu.vector_store %arg6[%c0_6, %c0_7], %7 {strides = array<i32>} : memref<256x128xf32, #tpu.memory_space<vmem>>, vector<256x128xf32>,
    return
  }
  func.func @transform_0(%arg0: i32, %arg1: i32, %arg2: i32) -> (i32, i32) {
    %c0_i32 = arith.constant 0 : i32
    return %arg0, %arg2 : i32, i32
  }
  func.func @transform_1(%arg0: i32, %arg1: i32, %arg2: i32) -> (i32, i32) {
    %c0_i32 = arith.constant 0 : i32
    return %arg2, %arg1 : i32, i32
  }
  func.func @transform_2(%arg0: i32, %arg1: i32, %arg2: i32) -> (i32, i32) {
    %c0_i32 = arith.constant 0 : i32
    %c0_i32_0 = arith.constant 0 : i32
    return %c0_i32, %arg1 : i32, i32
  }
  func.func @transform_3(%arg0: i32, %arg1: i32, %arg2: i32) -> (i32, i32) {
    %c0_i32 = arith.constant 0 : i32
    return %arg0, %arg1 : i32, i32
  }
}

</mosaic_0001>

<llo_original>
// kernel: tpu_custom_call.1
$region0: #{tpu_custom_call.1}
  #allocation0 [shape = 'u32[]', space=smem, size = 0x4, offset = 0x4, fixed_abs, tag = 'smem constant byte address 0x4 - core index']
  #allocation1 [shape = 'u32[144,128]{1,0:T(1,128)}', space=vmem, size = 0x12000, scoped, tag = 'internal scratch']
  %s0 = inlined_call_operand.vmem [shape: bf16[4096,36], index: 0, kind: input, shape index: {}]
  %s1 = inlined_call_operand.hbm [shape: bf16[36,128], index: 1, kind: input, shape index: {}]
  %s2 = inlined_call_operand.hbm [shape: f32[1,128], index: 2, kind: input, shape index: {}]
  %s3 = inlined_call_operand.hbm [shape: f32[4096,128], index: 3, kind: output, shape index: {}]
  %s4 = sld [smem:[#allocation0]]
  $region57: #{tpu_custom_call.1} parent=0
    _
  %s6 = ssub.s32 1, %s4
  %s7 = scalar_select 0, %s6, %s4
  $region1: #{tpu_custom_call.1} parent=0
    #allocation2 [shape = 'u8[10240]{0}', space=vmem, size = 0x2800, scoped, tag = 'input window, operand 1, single buffered']
    #allocation3 [shape = 's32[2]{0}', space=sflag, size = 0x8, scoped, tag = 'scoped memory for tpu_custom_call.1']
    #allocation4 [shape = 's32[2]{0}', space=sflag, size = 0x8, scoped, tag = 'scoped memory for tpu_custom_call.1']
    #allocation5 [shape = 'u8[512]{0}', space=vmem, size = 0x400, scoped, tag = 'input window, operand 2, single buffered']
    #allocation6 [shape = 's32[1]{0}', space=sflag, size = 0x4, scoped, tag = 'scoped memory for tpu_custom_call.1']
    #allocation7 [shape = 'u8[262144]{0}', space=vmem, size = 0x40000, scoped, tag = 'output window, operand 0']
    %8 = vsyncpa [#allocation3], 0
    %9 = vsyncpa [#allocation6], 0
    %10 = vsyncpa [#allocation4], 0
    %s11 = scalar_lea.sflag [#allocation4], 1
    %12 = vsyncpa %s11, 0
    loop: start=0, step=1, limit=18
    $region2: #{tpu_custom_call.1} parent=1 // loop_pre_header
      _
    $region3: #{tpu_custom_call.1} parent=1 // loop_header
      %s14 = sphi 0, %s18
      %p15 = scmp.ge.s32.totalorder %s14, 18
      %s21 = sphi 0, %s40
      %s22 = sphi 0, %s36
      %s23 = sphi 0, %s32
      %s24 = sphi 0, %s21
      %s25 = sphi 0, %s22
      %s26 = sphi 0, %s23
      %s27 = sphi 0, %s24
      %s28 = sphi 0, %s25
      %s29 = sphi 0, %s26
      %s45 = sphi 0, %s47
      %s48 = sphi 0, %s45
      %s49 = sphi 0, %s48
      %s65 = sphi 0, %s49
      %s73 = sphi 0, %s75
      %s76 = sphi 0, %s73
      %s77 = sphi 0, %s76
      %s93 = sphi 0, %s77
      %s99 = sphi 0, %s101
      %s102 = sphi 0, %s99
      %s103 = sphi 0, %s102
      %s119 = sphi 0, %s103
      %s127 = sphi 0, %s129
      %s130 = sphi 0, %s127
      %s131 = sphi 0, %s130
      %s147 = sphi 0, %s131
    $region4: #{tpu_custom_call.1} parent=1 // loop_header_branch
      %17 = sbr.rel (%p15) target = $region8
    $region5: #{tpu_custom_call.1} parent=1 // loop_body
      %s19 = ssub.s32 %s14, 1
      %s20 = ssub.s32 %s14, 2
      %s30 = sadd.s32 1, %s23
      %p31 = scmp.ge.s32.totalorder %s30, 1
      %s32 = scalar_select %p31, 0, %s30
      %s33 = sadd.s32 1, %s22
      %s34 = scalar_select %p31, %s33, %s22
      %p35 = scmp.ge.s32.totalorder %s34, 1
      %s36 = scalar_select %p35, 0, %s34
      %s37 = sadd.s32 1, %s21
      %s38 = scalar_select %p35, %s37, %s21
      %p39 = scmp.ge.s32.totalorder %s38, 16
      %s40 = scalar_select %p39, 0, %s38
      %s41 = ssub.s32 %s21, %s40
      %s42 = ssub.s32 %s23, %s32
      %s43 = sor.u32 %s41, %s42
      %p44 = scmp.eq.s32.totalorder %s43, 0
      %s46 = sadd.s32 %s45, 1
      %s47 = scalar_select %p44, %s45, %s46
      %p50 = pneg %p44
      %p51 = scmp.eq.s32.totalorder %s14, 15
      %p52 = por %p50, %p51
      %p53 = scmp.ne.s32.totalorder %s45, %s48
      %p54 = scmp.eq.s32.totalorder %s14, 0
      %p55 = por %p53, %p54
      %p56 = scmp.ne.s32.totalorder %s45, %s48
      %p57 = scmp.eq.s32.totalorder %s19, 15
      %p58 = por %p56, %p57
      %p59 = scmp.ne.s32.totalorder %s48, %s49
      %p60 = scmp.eq.s32.totalorder %s19, 0
      %p61 = por %p59, %p60
      %p62 = scmp.ne.s32.totalorder %s48, %s49
      %p63 = scmp.eq.s32.totalorder %s20, 15
      %p64 = por %p62, %p63
      %p66 = scmp.ne.s32.totalorder %s49, %s65
      %p67 = scmp.eq.s32.totalorder %s20, 0
      %p68 = por %p66, %p67
      %s69 = ssub.s32 %s23, %s32
      %s70 = ssub.s32 %s22, %s36
      %s71 = sor.u32 %s69, %s70
      %p72 = scmp.eq.s32.totalorder %s71, 0
      %s74 = sadd.s32 %s73, 1
      %s75 = scalar_select %p72, %s73, %s74
      %p78 = pneg %p72
      %p79 = scmp.eq.s32.totalorder %s14, 15
      %p80 = por %p78, %p79
      %p81 = scmp.ne.s32.totalorder %s73, %s76
      %p82 = scmp.eq.s32.totalorder %s14, 0
      %p83 = por %p81, %p82
      %p84 = scmp.ne.s32.totalorder %s73, %s76
      %p85 = scmp.eq.s32.totalorder %s19, 15
      %p86 = por %p84, %p85
      %p87 = scmp.ne.s32.totalorder %s76, %s77
      %p88 = scmp.eq.s32.totalorder %s19, 0
      %p89 = por %p87, %p88
      %p90 = scmp.ne.s32.totalorder %s76, %s77
      %p91 = scmp.eq.s32.totalorder %s20, 15
      %p92 = por %p90, %p91
      %p94 = scmp.ne.s32.totalorder %s77, %s93
      %p95 = scmp.eq.s32.totalorder %s20, 0
      %p96 = por %p94, %p95
      %s97 = ssub.s32 %s22, %s36
      %p98 = scmp.eq.s32.totalorder %s97, 0
      %s100 = sadd.s32 %s99, 1
      %s101 = scalar_select %p98, %s99, %s100
      %p104 = pneg %p98
      %p105 = scmp.eq.s32.totalorder %s14, 15
      %p106 = por %p104, %p105
      %p107 = scmp.ne.s32.totalorder %s99, %s102
      %p108 = scmp.eq.s32.totalorder %s14, 0
      %p109 = por %p107, %p108
      %p110 = scmp.ne.s32.totalorder %s99, %s102
      %p111 = scmp.eq.s32.totalorder %s19, 15
      %p112 = por %p110, %p111
      %p113 = scmp.ne.s32.totalorder %s102, %s103
      %p114 = scmp.eq.s32.totalorder %s19, 0
      %p115 = por %p113, %p114
      %p116 = scmp.ne.s32.totalorder %s102, %s103
      %p117 = scmp.eq.s32.totalorder %s20, 15
      %p118 = por %p116, %p117
      %p120 = scmp.ne.s32.totalorder %s103, %s119
      %p121 = scmp.eq.s32.totalorder %s20, 0
      %p122 = por %p120, %p121
      %s123 = ssub.s32 %s21, %s40
      %s124 = ssub.s32 %s22, %s36
      %s125 = sor.u32 %s123, %s124
      %p126 = scmp.eq.s32.totalorder %s125, 0
      %s128 = sadd.s32 %s127, 1
      %s129 = scalar_select %p126, %s127, %s128
      %p132 = pneg %p126
      %p133 = scmp.eq.s32.totalorder %s14, 15
      %p134 = por %p132, %p133
      %p135 = scmp.ne.s32.totalorder %s127, %s130
      %p136 = scmp.eq.s32.totalorder %s14, 0
      %p137 = por %p135, %p136
      %p138 = scmp.ne.s32.totalorder %s127, %s130
      %p139 = scmp.eq.s32.totalorder %s19, 15
      %p140 = por %p138, %p139
      %p141 = scmp.ne.s32.totalorder %s130, %s131
      %p142 = scmp.eq.s32.totalorder %s19, 0
      %p143 = por %p141, %p142
      %p144 = scmp.ne.s32.totalorder %s130, %s131
      %p145 = scmp.eq.s32.totalorder %s20, 15
      %p146 = por %p144, %p145
      %p148 = scmp.ne.s32.totalorder %s131, %s147
      %p149 = scmp.eq.s32.totalorder %s20, 0
      %p150 = por %p148, %p149
      %p151 = scmp.le.s32.totalorder 1, %s14
      %p152 = scmp.lt.s32.totalorder %s14, 17
      %p153 = pnand %p151, %p152
      %p154 = pneg %p153
      // Predicated region
      $region9: #{tpu_custom_call.1} parent=5 // pred_check
        _
      $region10: #{tpu_custom_call.1} parent=5 // pred_check_branch
        %156 = sbr.rel (%p153) target = $region12
      $region11: #{tpu_custom_call.1} parent=5 // pred_region
        %s157 = ssub.s32 %s14, 1
        // Predicated region
        $region13: #{tpu_custom_call.1} parent=11 // pred_check
          %p158 = pneg %p89
        $region14: #{tpu_custom_call.1} parent=11 // pred_check_branch
          %160 = sbr.rel (%p158) target = $region16
        $region15: #{tpu_custom_call.1} parent=11 // pred_region
          %s161 = smul.u32 5, %s26
          %s163 = ssub.s32 320, 320
          %164 = vsyncadd [#allocation3], %s163
          %s165 = sadd.s32 %s25, %s161
          %s166 = smul.addr %s165, 64
          %s167 = scalar_lea.hbm %s1, %s166
          %s168 = sshll.u32 [#allocation2], 4
          %s169 = int_to_ptr.vmem [resolvable:$true] %s168
          %174 = dma.hbm_to_vmem [thread:$0]  %s167, 320, %s169, [#allocation3], 64, 64, 4
        $region16: #{tpu_custom_call.1} parent=11 // pred_fallthru
          _
        // Predicated region
        $region17: #{tpu_custom_call.1} parent=11 // pred_check
          %p175 = pneg %p115
        $region18: #{tpu_custom_call.1} parent=11 // pred_check_branch
          %177 = sbr.rel (%p175) target = $region20
        $region19: #{tpu_custom_call.1} parent=11 // pred_region
          %s179 = ssub.s32 16, 16
          %180 = vsyncadd [#allocation6], %s179
          %s181 = smul.addr %s25, 16
          %s182 = scalar_lea.hbm %s2, %s181
          %s184 = sshll.u32 [#allocation5], 4
          %s185 = int_to_ptr.vmem [resolvable:$true] %s184
          %187 = dma.hbm_to_vmem [thread:$0]  %s182, 16, %s185, [#allocation6]
        $region20: #{tpu_custom_call.1} parent=11 // pred_fallthru
          _
      $region12: #{tpu_custom_call.1} parent=5 // pred_fallthru
        _
      %p188 = scmp.lt.s32.totalorder %s14, 16
      // Predicated region
      $region21: #{tpu_custom_call.1} parent=5 // pred_check
        %p189 = pneg %p188
      $region22: #{tpu_custom_call.1} parent=5 // pred_check_branch
        %191 = sbr.rel (%p189) target = $region24
      $region23: #{tpu_custom_call.1} parent=5 // pred_region
        // Predicated region
        $region25: #{tpu_custom_call.1} parent=23 // pred_check
          %p192 = pneg %p55
        $region26: #{tpu_custom_call.1} parent=23 // pred_check_branch
          %194 = sbr.rel (%p192) target = $region28
        $region27: #{tpu_custom_call.1} parent=23 // pred_region
          %s195 = smul.u32 32, %s21
          %p196 = scmp.lt.s32.totalorder %s195, 511
          %s197 = scalar_select %p196, %s195, 511
          %p198 = scmp.lt.s32.totalorder %s23, 0
          %s199 = scalar_select %p198, %s23, 0
          %s200 = sadd.s32 %s199, %s197
          %s201 = smul.addr %s200, 4
          %s202 = scalar_lea.vmem %s0, %s201
          %s203 = smul.u32 32, %s21
        $region28: #{tpu_custom_call.1} parent=23 // pred_fallthru
          _
      $region24: #{tpu_custom_call.1} parent=5 // pred_fallthru
        _
      %p204 = scmp.le.s32.totalorder 1, %s14
      %p205 = scmp.lt.s32.totalorder %s14, 17
      %p206 = pnand %p204, %p205
      %p207 = pneg %p206
      // Predicated region
      $region29: #{tpu_custom_call.1} parent=5 // pred_check
        _
      $region30: #{tpu_custom_call.1} parent=5 // pred_check_branch
        %209 = sbr.rel (%p206) target = $region32
      $region31: #{tpu_custom_call.1} parent=5 // pred_region
        %s210 = ssub.s32 %s14, 1
        // Predicated region
        $region33: #{tpu_custom_call.1} parent=31 // pred_check
          %p211 = pneg %p89
        $region34: #{tpu_custom_call.1} parent=31 // pred_check_branch
          %213 = sbr.rel (%p211) target = $region36
        $region35: #{tpu_custom_call.1} parent=31 // pred_region
          %214 = dma.done [#allocation3], 320
        $region36: #{tpu_custom_call.1} parent=31 // pred_fallthru
          _
        // Predicated region
        $region37: #{tpu_custom_call.1} parent=31 // pred_check
          %p215 = pneg %p115
        $region38: #{tpu_custom_call.1} parent=31 // pred_check_branch
          %217 = sbr.rel (%p215) target = $region40
        $region39: #{tpu_custom_call.1} parent=31 // pred_region
          %218 = dma.done [#allocation6], 16
        $region40: #{tpu_custom_call.1} parent=31 // pred_fallthru
          _
        %s219 = smul.u32 32, %s24
        %p220 = scmp.lt.s32.totalorder %s219, 511
        %s221 = scalar_select %p220, %s219, 511
        %p222 = scmp.lt.s32.totalorder %s26, 0
        %s223 = scalar_select %p222, %s26, 0
        %s224 = sadd.s32 %s223, %s221
        %s225 = smul.addr %s224, 4
        %s226 = scalar_lea.vmem %s0, %s225
        %p227 = pneg %p61
        %p228 = pneg %p58
        %p229 = pneg %p89
        %p230 = pneg %p86
        %p231 = pneg %p115
        %p232 = pneg %p112
        %p233 = pneg %p143
        %p234 = pneg %p140
        %s235 = sand.u32 %s130, 1
        %s236 = scalar_lea.sflag [#allocation4], %s235
        %s237 = sand.u32 %s130, 1
        %s238 = smul.addr %s237, 256
        %s239 = scalar_lea.vmem [#allocation7], %s238
        %s240 = smul.u32 32, %s24
        %p241 = scmp.lt.s32.totalorder %s240, 511
        %s242 = scalar_select %p241, %s240, 511
        %p243 = scmp.lt.s32.totalorder %s26, 0
        %s244 = scalar_select %p243, %s26, 0
        %s245 = sadd.s32 %s244, %s242
        %s246 = smul.addr %s245, 4
        %s247 = scalar_lea.vmem %s0, %s246
        %s248 = smul.u32 32, %s24
        %s249 = smul.u32 5, %s26
        %s250 = smul.u32 32, %s24
        %p252 = scmp.eq.s32.totalorder %s26, 0
        // Predicated region
        $region41: #{tpu_custom_call.1} parent=31 // pred_check
          %p253 = pneg %p252
        $region42: #{tpu_custom_call.1} parent=31 // pred_check_branch
          %255 = sbr.rel (%p253) target = $region44
        $region43: #{tpu_custom_call.1} parent=31 // pred_region
          %v256 = vld [vmem:[#allocation5] sm:$0x1]
          %v258 = vlaneseq
          %v259 = vshrl.u32 %v258, 7
          %v260 = vsub.s32 0, %v259
          %v261 = vrot.slane %v256, %v260
          %263 = vst [vmem:[%s239] sm:$0xff] %v261
          %264 = vst [vmem:[%s239 + $0x8] sm:$0xff] %v261
          %265 = vst [vmem:[%s239 + $0x10] sm:$0xff] %v261
          %266 = vst [vmem:[%s239 + $0x18] sm:$0xff] %v261
          %267 = vst [vmem:[%s239 + $0x20] sm:$0xff] %v261
          %268 = vst [vmem:[%s239 + $0x28] sm:$0xff] %v261
          %269 = vst [vmem:[%s239 + $0x30] sm:$0xff] %v261
          %270 = vst [vmem:[%s239 + $0x38] sm:$0xff] %v261
          %271 = vst [vmem:[%s239 + $0x40] sm:$0xff] %v261
          %272 = vst [vmem:[%s239 + $0x48] sm:$0xff] %v261
          %273 = vst [vmem:[%s239 + $0x50] sm:$0xff] %v261
          %274 = vst [vmem:[%s239 + $0x58] sm:$0xff] %v261
          %275 = vst [vmem:[%s239 + $0x60] sm:$0xff] %v261
          %276 = vst [vmem:[%s239 + $0x68] sm:$0xff] %v261
          %277 = vst [vmem:[%s239 + $0x70] sm:$0xff] %v261
          %278 = vst [vmem:[%s239 + $0x78] sm:$0xff] %v261
          %279 = vst [vmem:[%s239 + $0x80] sm:$0xff] %v261
          %280 = vst [vmem:[%s239 + $0x88] sm:$0xff] %v261
          %281 = vst [vmem:[%s239 + $0x90] sm:$0xff] %v261
          %282 = vst [vmem:[%s239 + $0x98] sm:$0xff] %v261
          %283 = vst [vmem:[%s239 + $0xa0] sm:$0xff] %v261
          %284 = vst [vmem:[%s239 + $0xa8] sm:$0xff] %v261
          %285 = vst [vmem:[%s239 + $0xb0] sm:$0xff] %v261
          %286 = vst [vmem:[%s239 + $0xb8] sm:$0xff] %v261
          %287 = vst [vmem:[%s239 + $0xc0] sm:$0xff] %v261
          %288 = vst [vmem:[%s239 + $0xc8] sm:$0xff] %v261
          %289 = vst [vmem:[%s239 + $0xd0] sm:$0xff] %v261
          %290 = vst [vmem:[%s239 + $0xd8] sm:$0xff] %v261
          %291 = vst [vmem:[%s239 + $0xe0] sm:$0xff] %v261
          %292 = vst [vmem:[%s239 + $0xe8] sm:$0xff] %v261
          %293 = vst [vmem:[%s239 + $0xf0] sm:$0xff] %v261
          %294 = vst [vmem:[%s239 + $0xf8] sm:$0xff] %v261
        $region44: #{tpu_custom_call.1} parent=31 // pred_fallthru
          _
        %v295 = vld [vmem:[%s239] sm:$0xff]
        %v296 = vld [vmem:[%s239 + $0x8] sm:$0xff]
        %v297 = vld [vmem:[%s239 + $0x10] sm:$0xff]
        %v298 = vld [vmem:[%s239 + $0x18] sm:$0xff]
        %v299 = vld [vmem:[%s239 + $0x20] sm:$0xff]
        %v300 = vld [vmem:[%s239 + $0x28] sm:$0xff]
        %v301 = vld [vmem:[%s239 + $0x30] sm:$0xff]
        %v302 = vld [vmem:[%s239 + $0x38] sm:$0xff]
        %v303 = vld [vmem:[%s239 + $0x40] sm:$0xff]
        %v304 = vld [vmem:[%s239 + $0x48] sm:$0xff]
        %v305 = vld [vmem:[%s239 + $0x50] sm:$0xff]
        %v306 = vld [vmem:[%s239 + $0x58] sm:$0xff]
        %v307 = vld [vmem:[%s239 + $0x60] sm:$0xff]
        %v308 = vld [vmem:[%s239 + $0x68] sm:$0xff]
        %v309 = vld [vmem:[%s239 + $0x70] sm:$0xff]
        %v310 = vld [vmem:[%s239 + $0x78] sm:$0xff]
        %v311 = vld [vmem:[%s239 + $0x80] sm:$0xff]
        %v312 = vld [vmem:[%s239 + $0x88] sm:$0xff]
        %v313 = vld [vmem:[%s239 + $0x90] sm:$0xff]
        %v314 = vld [vmem:[%s239 + $0x98] sm:$0xff]
        %v315 = vld [vmem:[%s239 + $0xa0] sm:$0xff]
        %v316 = vld [vmem:[%s239 + $0xa8] sm:$0xff]
        %v317 = vld [vmem:[%s239 + $0xb0] sm:$0xff]
        %v318 = vld [vmem:[%s239 + $0xb8] sm:$0xff]
        %v319 = vld [vmem:[%s239 + $0xc0] sm:$0xff]
        %v320 = vld [vmem:[%s239 + $0xc8] sm:$0xff]
        %v321 = vld [vmem:[%s239 + $0xd0] sm:$0xff]
        %v322 = vld [vmem:[%s239 + $0xd8] sm:$0xff]
        %v323 = vld [vmem:[%s239 + $0xe0] sm:$0xff]
        %v324 = vld [vmem:[%s239 + $0xe8] sm:$0xff]
        %v325 = vld [vmem:[%s239 + $0xf0] sm:$0xff]
        %v326 = vld [vmem:[%s239 + $0xf8] sm:$0xff]
        %v327 = vld [vmem:[%s247] sm:$0xf]
        %v328 = vld [vmem:[%s247 + $0x4] sm:$0xf]
        %v329 = vld [vmem:[%s247 + $0x8] sm:$0xf]
        %v330 = vld [vmem:[%s247 + $0xc] sm:$0xf]
        %v331 = vld [vmem:[%s247 + $0x10] sm:$0xf]
        %v332 = vld [vmem:[%s247 + $0x14] sm:$0xf]
        %v333 = vld [vmem:[%s247 + $0x18] sm:$0xf]
        %v334 = vld [vmem:[%s247 + $0x1c] sm:$0xf]
        %v335 = vld [vmem:[%s247 + $0x20] sm:$0xf]
        %v336 = vld [vmem:[%s247 + $0x24] sm:$0xf]
        %v337 = vld [vmem:[%s247 + $0x28] sm:$0xf]
        %v338 = vld [vmem:[%s247 + $0x2c] sm:$0xf]
        %v339 = vld [vmem:[%s247 + $0x30] sm:$0xf]
        %v340 = vld [vmem:[%s247 + $0x34] sm:$0xf]
        %v341 = vld [vmem:[%s247 + $0x38] sm:$0xf]
        %v342 = vld [vmem:[%s247 + $0x3c] sm:$0xf]
        %v343 = vld [vmem:[%s247 + $0x40] sm:$0xf]
        %v344 = vld [vmem:[%s247 + $0x44] sm:$0xf]
        %v345 = vld [vmem:[%s247 + $0x48] sm:$0xf]
        %v346 = vld [vmem:[%s247 + $0x4c] sm:$0xf]
        %v347 = vld [vmem:[%s247 + $0x50] sm:$0xf]
        %v348 = vld [vmem:[%s247 + $0x54] sm:$0xf]
        %v349 = vld [vmem:[%s247 + $0x58] sm:$0xf]
        %v350 = vld [vmem:[%s247 + $0x5c] sm:$0xf]
        %v351 = vld [vmem:[%s247 + $0x60] sm:$0xf]
        %v352 = vld [vmem:[%s247 + $0x64] sm:$0xf]
        %v353 = vld [vmem:[%s247 + $0x68] sm:$0xf]
        %v354 = vld [vmem:[%s247 + $0x6c] sm:$0xf]
        %v355 = vld [vmem:[%s247 + $0x70] sm:$0xf]
        %v356 = vld [vmem:[%s247 + $0x74] sm:$0xf]
        %v357 = vld [vmem:[%s247 + $0x78] sm:$0xf]
        %v358 = vld [vmem:[%s247 + $0x7c] sm:$0xf]
        %v359 = vld [vmem:[#allocation2] sm:$0xf]
        %v360 = vld [vmem:[#allocation2 + $0x4] sm:$0xf]
        %v361 = vld [vmem:[#allocation2 + $0x8] sm:$0xf]
        %v362 = vld [vmem:[#allocation2 + $0xc] sm:$0xf]
        %v363 = vld [vmem:[#allocation2 + $0x10] sm:$0x3]
        %v396 = vunpack.c.l.b16 %v327
        %v397 = vunpack.c.l.b16 %v328
        %v398 = vunpack.c.l.b16 %v329
        %v399 = vunpack.c.l.b16 %v330
        %v400 = vunpack.c.l.b16 %v331
        %v401 = vunpack.c.l.b16 %v332
        %v402 = vunpack.c.l.b16 %v333
        %v403 = vunpack.c.l.b16 %v334
        %v404 = vunpack.c.l.b16 %v335
        %v405 = vunpack.c.l.b16 %v336
        %v406 = vunpack.c.l.b16 %v337
        %v407 = vunpack.c.l.b16 %v338
        %v408 = vunpack.c.l.b16 %v339
        %v409 = vunpack.c.l.b16 %v340
        %v410 = vunpack.c.l.b16 %v341
        %v411 = vunpack.c.l.b16 %v342
        %v412 = vunpack.c.l.b16 %v343
        %v413 = vunpack.c.l.b16 %v344
        %v414 = vunpack.c.l.b16 %v345
        %v415 = vunpack.c.l.b16 %v346
        %v416 = vunpack.c.l.b16 %v347
        %v417 = vunpack.c.l.b16 %v348
        %v418 = vunpack.c.l.b16 %v349
        %v419 = vunpack.c.l.b16 %v350
        %v420 = vunpack.c.l.b16 %v351
        %v421 = vunpack.c.l.b16 %v352
        %v422 = vunpack.c.l.b16 %v353
        %v423 = vunpack.c.l.b16 %v354
        %v424 = vunpack.c.l.b16 %v355
        %v425 = vunpack.c.l.b16 %v356
        %v426 = vunpack.c.l.b16 %v357
        %v427 = vunpack.c.l.b16 %v358
        %v428 = vpack.c.b16 %v397, %v396
        %v429 = vpack.c.b16 %v399, %v398
        %v430 = vpack.c.b16 %v401, %v400
        %v431 = vpack.c.b16 %v403, %v402
        %v432 = vpack.c.b16 %v405, %v404
        %v433 = vpack.c.b16 %v407, %v406
        %v434 = vpack.c.b16 %v409, %v408
        %v435 = vpack.c.b16 %v411, %v410
        %v436 = vpack.c.b16 %v413, %v412
        %v437 = vpack.c.b16 %v415, %v414
        %v438 = vpack.c.b16 %v417, %v416
        %v439 = vpack.c.b16 %v419, %v418
        %v440 = vpack.c.b16 %v421, %v420
        %v441 = vpack.c.b16 %v423, %v422
        %v442 = vpack.c.b16 %v425, %v424
        %v443 = vpack.c.b16 %v427, %v426
        %v449 = vunpack.c.l.b16 %v359
        %v450 = vunpack.c.l.b16 %v360
        %v451 = vunpack.c.l.b16 %v361
        %v452 = vunpack.c.l.b16 %v362
        %v453 = vunpack.c.l.b16 %v363
        %v454 = vpack.c.b16 %v450, %v449
        %v455 = vpack.c.b16 %v452, %v451
        %v456 = vpack.c.b16 %v453, %v453
        %vm459 = vcmask 293888
        %v461 = vsel %vm459, %v428, 0
        %v464 = vsel %vm459, %v429, 0
        %v467 = vsel %vm459, %v430, 0
        %v470 = vsel %vm459, %v431, 0
        %v473 = vsel %vm459, %v432, 0
        %v476 = vsel %vm459, %v433, 0
        %v479 = vsel %vm459, %v434, 0
        %v482 = vsel %vm459, %v435, 0
        %v485 = vsel %vm459, %v436, 0
        %v488 = vsel %vm459, %v437, 0
        %v491 = vsel %vm459, %v438, 0
        %v494 = vsel %vm459, %v439, 0
        %v497 = vsel %vm459, %v440, 0
        %v500 = vsel %vm459, %v441, 0
        %v503 = vsel %vm459, %v442, 0
        %v506 = vsel %vm459, %v443, 0
        %vm508 = vcmask 1041408
        %v510 = vsel %vm508, %v456, 0
        %512 = vmatprep.subr.bf16.mxu0 0
        %513 = vmatpush1.bf16.msra.mxu0 0
        %514 = vmatprep.subr.bf16.mxu0 0
        %515 = vmatpush1.bf16.msra.mxu0 0
        %516 = vmatprep.subr.bf16.mxu0 0
        %517 = vmatpush1.bf16.msra.mxu0 0
        %518 = vmatprep.subr.bf16.mxu0 0
        %519 = vmatpush1.bf16.msra.mxu0 0
        %520 = vmatprep.subr.bf16.mxu0 0
        %521 = vmatpush1.bf16.msra.mxu0 0
        %522 = vmatprep.subr.bf16.mxu0 0
        %523 = vmatpush1.bf16.msra.mxu0 %v510
        %524 = vmatprep.subr.bf16.mxu0 0
        %525 = vmatpush1.bf16.msra.mxu0 %v455
        %526 = vmatprep.subr.bf16.mxu0 0
        %527 = vmatpush1.bf16.msra.mxu0 %v454
        %528 = vmatprep.subr.bf16.mxu0 0
        %529 = vmatpush2.bf16.msra.mxu0 0
        %530 = vmatprep.subr.bf16.mxu0 0
        %531 = vmatpush2.bf16.msra.mxu0 0
        %532 = vmatprep.subr.bf16.mxu0 0
        %533 = vmatpush2.bf16.msra.mxu0 0
        %534 = vmatprep.subr.bf16.mxu0 0
        %535 = vmatpush2.bf16.msra.mxu0 0
        %536 = vmatprep.subr.bf16.mxu0 0
        %537 = vmatpush2.bf16.msra.mxu0 0
        %538 = vmatprep.subr.bf16.mxu0 0
        %539 = vmatpush2.bf16.msra.mxu0 0
        %540 = vmatprep.subr.bf16.mxu0 0
        %541 = vmatpush2.bf16.msra.mxu0 0
        %542 = vmatprep.subr.bf16.mxu0 0
        %543 = vmatpush2.bf16.msra.mxu0 0
        %544 = vmatprep.mubr.bf16.mxu0 0
        %545 = vmatmul.mubr.bf16.gmra.mxu0 %v461
        %v546 = vpop.f32.mrf.mxu0
        %v547 = vadd.f32 0.0, %v546
        %v548 = vpop.f32.mrf.mxu0
        %v549 = vpop.f32.mrf.mxu0
        %v550 = vadd.f32 0.0, %v549
        %v551 = vpop.f32.mrf.mxu0
        %552 = vmatprep.mubr.bf16.mxu0 0
        %553 = vmatmul.mubr.bf16.gmra.mxu0 %v464
        %v554 = vpop.f32.mrf.mxu0
        %v555 = vadd.f32 0.0, %v554
        %v556 = vpop.f32.mrf.mxu0
        %v557 = vpop.f32.mrf.mxu0
        %v558 = vadd.f32 0.0, %v557
        %v559 = vpop.f32.mrf.mxu0
        %560 = vmatprep.mubr.bf16.mxu0 0
        %561 = vmatmul.mubr.bf16.gmra.mxu0 %v467
        %v562 = vpop.f32.mrf.mxu0
        %v563 = vadd.f32 0.0, %v562
        %v564 = vpop.f32.mrf.mxu0
        %v565 = vpop.f32.mrf.mxu0
        %v566 = vadd.f32 0.0, %v565
        %v567 = vpop.f32.mrf.mxu0
        %568 = vmatprep.mubr.bf16.mxu0 0
        %569 = vmatmul.mubr.bf16.gmra.mxu0 %v470
        %v570 = vpop.f32.mrf.mxu0
        %v571 = vadd.f32 0.0, %v570
        %v572 = vpop.f32.mrf.mxu0
        %v573 = vpop.f32.mrf.mxu0
        %v574 = vadd.f32 0.0, %v573
        %v575 = vpop.f32.mrf.mxu0
        %576 = vmatprep.mubr.bf16.mxu0 0
        %577 = vmatmul.mubr.bf16.gmra.mxu0 %v473
        %v578 = vpop.f32.mrf.mxu0
        %v579 = vadd.f32 0.0, %v578
        %v580 = vpop.f32.mrf.mxu0
        %v581 = vpop.f32.mrf.mxu0
        %v582 = vadd.f32 0.0, %v581
        %v583 = vpop.f32.mrf.mxu0
        %584 = vmatprep.mubr.bf16.mxu0 0
        %585 = vmatmul.mubr.bf16.gmra.mxu0 %v476
        %v586 = vpop.f32.mrf.mxu0
        %v587 = vadd.f32 0.0, %v586
        %v588 = vpop.f32.mrf.mxu0
        %v589 = vpop.f32.mrf.mxu0
        %v590 = vadd.f32 0.0, %v589
        %v591 = vpop.f32.mrf.mxu0
        %592 = vmatprep.mubr.bf16.mxu0 0
        %593 = vmatmul.mubr.bf16.gmra.mxu0 %v479
        %v594 = vpop.f32.mrf.mxu0
        %v595 = vadd.f32 0.0, %v594
        %v596 = vpop.f32.mrf.mxu0
        %v597 = vpop.f32.mrf.mxu0
        %v598 = vadd.f32 0.0, %v597
        %v599 = vpop.f32.mrf.mxu0
        %600 = vmatprep.mubr.bf16.mxu0 0
        %601 = vmatmul.mubr.bf16.gmra.mxu0 %v482
        %v602 = vpop.f32.mrf.mxu0
        %v603 = vadd.f32 0.0, %v602
        %v604 = vpop.f32.mrf.mxu0
        %v605 = vpop.f32.mrf.mxu0
        %v606 = vadd.f32 0.0, %v605
        %v607 = vpop.f32.mrf.mxu0
        %608 = vmatprep.mubr.bf16.mxu0 0
        %609 = vmatmul.mubr.bf16.gmra.mxu0 %v485
        %v610 = vpop.f32.mrf.mxu0
        %v611 = vadd.f32 0.0, %v610
        %v612 = vpop.f32.mrf.mxu0
        %v613 = vpop.f32.mrf.mxu0
        %v614 = vadd.f32 0.0, %v613
        %v615 = vpop.f32.mrf.mxu0
        %616 = vmatprep.mubr.bf16.mxu0 0
        %617 = vmatmul.mubr.bf16.gmra.mxu0 %v488
        %v618 = vpop.f32.mrf.mxu0
        %v619 = vadd.f32 0.0, %v618
        %v620 = vpop.f32.mrf.mxu0
        %v621 = vpop.f32.mrf.mxu0
        %v622 = vadd.f32 0.0, %v621
        %v623 = vpop.f32.mrf.mxu0
        %624 = vmatprep.mubr.bf16.mxu0 0
        %625 = vmatmul.mubr.bf16.gmra.mxu0 %v491
        %v626 = vpop.f32.mrf.mxu0
        %v627 = vadd.f32 0.0, %v626
        %v628 = vpop.f32.mrf.mxu0
        %v629 = vpop.f32.mrf.mxu0
        %v630 = vadd.f32 0.0, %v629
        %v631 = vpop.f32.mrf.mxu0
        %632 = vmatprep.mubr.bf16.mxu0 0
        %633 = vmatmul.mubr.bf16.gmra.mxu0 %v494
        %v634 = vpop.f32.mrf.mxu0
        %v635 = vadd.f32 0.0, %v634
        %v636 = vpop.f32.mrf.mxu0
        %v637 = vpop.f32.mrf.mxu0
        %v638 = vadd.f32 0.0, %v637
        %v639 = vpop.f32.mrf.mxu0
        %640 = vmatprep.mubr.bf16.mxu0 0
        %641 = vmatmul.mubr.bf16.gmra.mxu0 %v497
        %v642 = vpop.f32.mrf.mxu0
        %v643 = vadd.f32 0.0, %v642
        %v644 = vpop.f32.mrf.mxu0
        %v645 = vpop.f32.mrf.mxu0
        %v646 = vadd.f32 0.0, %v645
        %v647 = vpop.f32.mrf.mxu0
        %648 = vmatprep.mubr.bf16.mxu0 0
        %649 = vmatmul.mubr.bf16.gmra.mxu0 %v500
        %v650 = vpop.f32.mrf.mxu0
        %v651 = vadd.f32 0.0, %v650
        %v652 = vpop.f32.mrf.mxu0
        %v653 = vpop.f32.mrf.mxu0
        %v654 = vadd.f32 0.0, %v653
        %v655 = vpop.f32.mrf.mxu0
        %656 = vmatprep.mubr.bf16.mxu0 0
        %657 = vmatmul.mubr.bf16.gmra.mxu0 %v503
        %v658 = vpop.f32.mrf.mxu0
        %v659 = vadd.f32 0.0, %v658
        %v660 = vpop.f32.mrf.mxu0
        %v661 = vpop.f32.mrf.mxu0
        %v662 = vadd.f32 0.0, %v661
        %v663 = vpop.f32.mrf.mxu0
        %664 = vmatprep.mubr.bf16.mxu0 0
        %665 = vmatmul.mubr.bf16.gmra.mxu0 %v506
        %v666 = vpop.f32.mrf.mxu0
        %v667 = vadd.f32 0.0, %v666
        %v668 = vpop.f32.mrf.mxu0
        %v669 = vpop.f32.mrf.mxu0
        %v670 = vadd.f32 0.0, %v669
        %v671 = vpop.f32.mrf.mxu0
        %672 = vdwg.mxu0
        %v673 = vadd.f32 %v295, %v547
        %v674 = vadd.f32 %v296, %v550
        %v675 = vadd.f32 %v297, %v555
        %v676 = vadd.f32 %v298, %v558
        %v677 = vadd.f32 %v299, %v563
        %v678 = vadd.f32 %v300, %v566
        %v679 = vadd.f32 %v301, %v571
        %v680 = vadd.f32 %v302, %v574
        %v681 = vadd.f32 %v303, %v579
        %v682 = vadd.f32 %v304, %v582
        %v683 = vadd.f32 %v305, %v587
        %v684 = vadd.f32 %v306, %v590
        %v685 = vadd.f32 %v307, %v595
        %v686 = vadd.f32 %v308, %v598
        %v687 = vadd.f32 %v309, %v603
        %v688 = vadd.f32 %v310, %v606
        %v689 = vadd.f32 %v311, %v611
        %v690 = vadd.f32 %v312, %v614
        %v691 = vadd.f32 %v313, %v619
        %v692 = vadd.f32 %v314, %v622
        %v693 = vadd.f32 %v315, %v627
        %v694 = vadd.f32 %v316, %v630
        %v695 = vadd.f32 %v317, %v635
        %v696 = vadd.f32 %v318, %v638
        %v697 = vadd.f32 %v319, %v643
        %v698 = vadd.f32 %v320, %v646
        %v699 = vadd.f32 %v321, %v651
        %v700 = vadd.f32 %v322, %v654
        %v701 = vadd.f32 %v323, %v659
        %v702 = vadd.f32 %v324, %v662
        %v703 = vadd.f32 %v325, %v667
        %v704 = vadd.f32 %v326, %v670
        %705 = vst [vmem:[%s239] sm:$0xff] %v673
        %706 = vst [vmem:[%s239 + $0x8] sm:$0xff] %v674
        %707 = vst [vmem:[%s239 + $0x10] sm:$0xff] %v675
        %708 = vst [vmem:[%s239 + $0x18] sm:$0xff] %v676
        %709 = vst [vmem:[%s239 + $0x20] sm:$0xff] %v677
        %710 = vst [vmem:[%s239 + $0x28] sm:$0xff] %v678
        %711 = vst [vmem:[%s239 + $0x30] sm:$0xff] %v679
        %712 = vst [vmem:[%s239 + $0x38] sm:$0xff] %v680
        %713 = vst [vmem:[%s239 + $0x40] sm:$0xff] %v681
        %714 = vst [vmem:[%s239 + $0x48] sm:$0xff] %v682
        %715 = vst [vmem:[%s239 + $0x50] sm:$0xff] %v683
        %716 = vst [vmem:[%s239 + $0x58] sm:$0xff] %v684
        %717 = vst [vmem:[%s239 + $0x60] sm:$0xff] %v685
        %718 = vst [vmem:[%s239 + $0x68] sm:$0xff] %v686
        %719 = vst [vmem:[%s239 + $0x70] sm:$0xff] %v687
        %720 = vst [vmem:[%s239 + $0x78] sm:$0xff] %v688
        %721 = vst [vmem:[%s239 + $0x80] sm:$0xff] %v689
        %722 = vst [vmem:[%s239 + $0x88] sm:$0xff] %v690
        %723 = vst [vmem:[%s239 + $0x90] sm:$0xff] %v691
        %724 = vst [vmem:[%s239 + $0x98] sm:$0xff] %v692
        %725 = vst [vmem:[%s239 + $0xa0] sm:$0xff] %v693
        %726 = vst [vmem:[%s239 + $0xa8] sm:$0xff] %v694
        %727 = vst [vmem:[%s239 + $0xb0] sm:$0xff] %v695
        %728 = vst [vmem:[%s239 + $0xb8] sm:$0xff] %v696
        %729 = vst [vmem:[%s239 + $0xc0] sm:$0xff] %v697
        %730 = vst [vmem:[%s239 + $0xc8] sm:$0xff] %v698
        %731 = vst [vmem:[%s239 + $0xd0] sm:$0xff] %v699
        %732 = vst [vmem:[%s239 + $0xd8] sm:$0xff] %v700
        %733 = vst [vmem:[%s239 + $0xe0] sm:$0xff] %v701
        %734 = vst [vmem:[%s239 + $0xe8] sm:$0xff] %v702
        %735 = vst [vmem:[%s239 + $0xf0] sm:$0xff] %v703
        %736 = vst [vmem:[%s239 + $0xf8] sm:$0xff] %v704
        %s737 = sand.u32 %s130, 1
        %s738 = scalar_lea.sflag [#allocation4], %s737
        %s739 = sand.u32 %s130, 1
        %s740 = smul.addr %s739, 256
        %s741 = scalar_lea.vmem [#allocation7], %s740
        // Predicated region
        $region45: #{tpu_custom_call.1} parent=31 // pred_check
          %p742 = pneg %p140
        $region46: #{tpu_custom_call.1} parent=31 // pred_check_branch
          %744 = sbr.rel (%p742) target = $region48
        $region47: #{tpu_custom_call.1} parent=31 // pred_region
          %s745 = smul.u32 32, %s24
          %s747 = ssub.s32 4096, 4096
          %748 = vsyncadd %s738, %s747
          %s749 = sadd.s32 %s25, %s745
          %s750 = smul.addr %s749, 128
          %s751 = scalar_lea.hbm %s3, %s750
          %s752 = sshll.u32 %s741, 4
          %s753 = int_to_ptr.vmem [resolvable:$true] %s752
          %758 = dma.vmem_to_hbm [thread:$0]  %s753, 4096, %s751, %s738, 128, 128, 8
        $region48: #{tpu_custom_call.1} parent=31 // pred_fallthru
          _
      $region32: #{tpu_custom_call.1} parent=5 // pred_fallthru
        _
      %p759 = scmp.le.s32.totalorder 2, %s14
      // Predicated region
      $region49: #{tpu_custom_call.1} parent=5 // pred_check
        %p760 = pneg %p759
      $region50: #{tpu_custom_call.1} parent=5 // pred_check_branch
        %762 = sbr.rel (%p760) target = $region52
      $region51: #{tpu_custom_call.1} parent=5 // pred_region
        %s763 = ssub.s32 %s14, 2
        // Predicated region
        $region53: #{tpu_custom_call.1} parent=51 // pred_check
          %p764 = pneg %p146
        $region54: #{tpu_custom_call.1} parent=51 // pred_check_branch
          %766 = sbr.rel (%p764) target = $region56
        $region55: #{tpu_custom_call.1} parent=51 // pred_region
          %s767 = sand.u32 %s131, 1
          %s768 = scalar_lea.sflag [#allocation4], %s767
          %s769 = sand.u32 %s131, 1
          %s770 = smul.addr %s769, 256
          %s771 = scalar_lea.vmem [#allocation7], %s770
          %772 = dma.done %s768, 4096
        $region56: #{tpu_custom_call.1} parent=51 // pred_fallthru
          _
      $region52: #{tpu_custom_call.1} parent=5 // pred_fallthru
        _
    $region6: #{tpu_custom_call.1} parent=1 // loop_footer
      %s18 = sadd.s32 1, %s14
    $region7: #{tpu_custom_call.1} parent=1 // loop_footer_branch
      %13 = sbr.rel target = $region3
    $region8: #{tpu_custom_call.1} parent=1 // loop_exit
      _
    %773 = vsyncpa [#allocation3], 1
    %s774 = scalar_lea.sflag [#allocation3], 1
    %775 = vsyncpa %s774, 1
    %776 = vsyncpa [#allocation6], 1
    %777 = vsyncpa [#allocation4], 1
    %s778 = scalar_lea.sflag [#allocation4], 1
    %779 = vsyncpa %s778, 1

</llo_original>
